<compile_context>
chip_gen: v7x
topology: tpu7x:2x2x1
jax: 0.10.0
libtpu: 0.0.40
codegen_flags: <defaults>
</compile_context>

<pallas_src>
import functools

import jax
import jax.numpy as jnp
from jax.experimental import pallas as pl
from jax.experimental.pallas import tpu as pltpu


# ----------------------------- model dimensions -----------------------------
VOCAB = 64           # len(token_to_index)   (small synthetic vocab)
VECTOR_SIZE = 128    # "vector_size=300" in the module; kept small & lane-aligned here
HIDDEN = (256, 128)  # hidden_layers=[256, 128]
N_LABELS = 8
LABELS_PAD = 128     # lane-dense padded output width (sliced back to N_LABELS in JAX)
DROPOUT_P = 0.3

BATCH = 8
SEQ = 8


# --------------------------- in-kernel PRNG helpers --------------------------
def _uniform31(shape, salt, seed):
    """Counter-based hash -> non-negative int32 with 31 uniform bits per element.

    Pure int32 VPU ops (iota, mul, xor, logical shifts), so it lowers identically on
    Mosaic and in interpret mode (unlike pltpu.prng_*, which has no CPU path)."""
    srl = jax.lax.shift_right_logical
    r = jax.lax.broadcasted_iota(jnp.int32, shape, 0)
    c = jax.lax.broadcasted_iota(jnp.int32, shape, 1)
    x = r * jnp.int32(shape[1]) + c + jnp.int32(salt)
    x = x + seed * jnp.int32(-1640531527)        # 0x9E3779B9 (golden ratio), wraps
    x = x ^ srl(x, jnp.int32(16))
    x = x * jnp.int32(-2048144789)               # 0x85EBCA6B
    x = x ^ srl(x, jnp.int32(13))
    x = x * jnp.int32(-1028477387)               # 0xC2B2AE35
    x = x ^ srl(x, jnp.int32(16))
    return x & jnp.int32(0x7FFFFFFF)


def _dropout(x, p, salt, seed):
    """Inverted dropout (matches F.dropout(x, p, training=True)): one integer threshold
    compare on the raw hash bits, kept values scaled by 1/(1-p)."""
    bits = _uniform31(x.shape, salt, seed)
    threshold = jnp.int32(int((1.0 - p) * 2147483648.0))   # keep-prob quantized to 31 bits
    keep = bits < threshold
    return jnp.where(keep, x * (1.0 / (1.0 - p)), jnp.zeros_like(x))


# ------------------------------- Pallas kernel ------------------------------
def mlp_kernel(seed_ref,                 # SMEM (1,) int32   dropout seed
               tokens_ref,               # [B, S]  int32     token ids
               emb_ref,                  # [VOCAB, D] f32    embedding table (row 0 = zeros)
               w1_ref, b1_ref,           # [D, H1], [1, H1]
               w2_ref, b2_ref,           # [H1, H2], [1, H2]
               w3_ref, b3_ref,           # [H2, LP], [1, LP]  (lane-padded output proj)
               o_ref,                    # [B, LP]  f32
               *, seq_len, vocab, dropout_p, training):
    seed = seed_ref[0]

    # ---- fused embedding lookup + sequence mean:  mean_x = (one_hot_counts / S) @ emb ----
    # (divides by the full S including padding tokens, exactly like torch.mean(dim=1) on the
    #  padded sequence; padding row 0 of the table is all-zeros.)
    tok = tokens_ref[...]                                        # [B, S] int32
    b_dim = tok.shape[0]
    lane_iota = jax.lax.broadcasted_iota(jnp.int32, (b_dim, vocab), 1)
    counts = jnp.zeros((b_dim, vocab), jnp.float32)
    for s in range(seq_len):                                     # static unroll, S is tiny
        counts = counts + (tok[:, s:s + 1] == lane_iota).astype(jnp.float32)
    counts = counts * (1.0 / seq_len)
    x = jnp.dot(counts, emb_ref[...], preferred_element_type=jnp.float32)   # [B, D] f32

    # ---- hidden layer 1: ReLU(x @ W1 + b1), dropout  (bf16 MXU operands, f32 accumulate) ----
    h = jnp.dot(x.astype(jnp.bfloat16), w1_ref[...].astype(jnp.bfloat16),
                preferred_element_type=jnp.float32) + b1_ref[...]
    h = jnp.maximum(h, 0.0)
    if training and dropout_p:
        h = _dropout(h, dropout_p, salt=0x12340001, seed=seed)

    # ---- hidden layer 2: ReLU(h @ W2 + b2), dropout ----
    h = jnp.dot(h.astype(jnp.bfloat16), w2_ref[...].astype(jnp.bfloat16),
                preferred_element_type=jnp.float32) + b2_ref[...]
    h = jnp.maximum(h, 0.0)
    if training and dropout_p:
        h = _dropout(h, dropout_p, salt=0x12340002, seed=seed)

    # ---- output layer (lane-dense [B, 128] store; real labels are the first N columns) ----
    o_ref[...] = jnp.dot(h.astype(jnp.bfloat16), w3_ref[...].astype(jnp.bfloat16),
                         preferred_element_type=jnp.float32) + b3_ref[...]


# --------------------------------- wrapper ----------------------------------
@functools.partial(jax.jit, static_argnames=("dropout_p", "training", "n_labels"))
def mlp_classifier_forward(tokens, embeddings, params, seed,
                           dropout_p=DROPOUT_P, training=True, n_labels=N_LABELS):
    """tokens: [B, S] int32; embeddings: [VOCAB, D] f32;
    params: dict of transposed ([in, out]) weights, w3/b3 lane-padded to LABELS_PAD."""
    w1, b1 = params["w1"], params["b1"]
    w2, b2 = params["w2"], params["b2"]
    w3, b3 = params["w3"], params["b3"]

    B, S = tokens.shape
    vocab, _ = embeddings.shape
    LP = w3.shape[1]

    vmem = pl.BlockSpec(memory_space=pltpu.MemorySpace.VMEM)
    smem = pl.BlockSpec(memory_space=pltpu.MemorySpace.SMEM)

    kernel = functools.partial(mlp_kernel, seq_len=S, vocab=vocab,
                               dropout_p=dropout_p, training=training)

    out_padded = pl.pallas_call(
        kernel,
        out_shape=jax.ShapeDtypeStruct((B, LP), jnp.float32),
        in_specs=[smem, vmem, vmem, vmem, vmem, vmem, vmem, vmem, vmem],
        out_specs=vmem,
    )(seed, tokens, embeddings, w1, b1, w2, b2, w3, b3)

    return out_padded[:, :n_labels]


# ---------------------------- deterministic params ---------------------------
def init_params(key):
    # TODO(synk): real module loads gzip'd pretrained embeddings / token_to_index from disk;
    # here the table is randn with row 0 zeroed (padding_idx=0), matching the pre-load init.
    ks = jax.random.split(key, 8)
    D, H1, H2, L = VECTOR_SIZE, HIDDEN[0], HIDDEN[1], N_LABELS

    emb = jax.random.normal(ks[0], (VOCAB, D), jnp.float32)
    emb = emb.at[0].set(0.0)

    def linear(kw, kb, fan_in, fan_out):
        bound = fan_in ** -0.5
        w = jax.random.uniform(kw, (fan_in, fan_out), jnp.float32, -bound, bound)
        b = jax.random.uniform(kb, (1, fan_out), jnp.float32, -bound, bound)
        return w, b

    w1, b1 = linear(ks[1], ks[2], D, H1)
    w2, b2 = linear(ks[3], ks[4], H1, H2)
    w3, b3 = linear(ks[5], ks[6], H2, L)

    # lane-dense output: zero-pad the output projection to LABELS_PAD columns
    w3 = jnp.pad(w3, ((0, 0), (0, LABELS_PAD - L)))
    b3 = jnp.pad(b3, ((0, 0), (0, LABELS_PAD - L)))

    return emb, dict(w1=w1, b1=b1, w2=w2, b2=b2, w3=w3, b3=b3)


# ----------------------------------- main ------------------------------------
if __name__ == "__main__":
    key = jax.random.PRNGKey(0)
    k_tok, k_par = jax.random.split(key)

    emb, params = init_params(k_par)
    tokens = jax.random.randint(k_tok, (BATCH, SEQ), 0, VOCAB, dtype=jnp.int32)
    seed = jnp.array([0], dtype=jnp.int32)   # deterministic dropout seed (SMEM scalar)

    out = mlp_classifier_forward(tokens, emb, params, seed)
    out = jax.block_until_ready(out)
    assert out.shape == (BATCH, N_LABELS) and out.dtype == jnp.float32

    print("KERNEL_OK")
</pallas_src>

<mosaic_0001>
module attributes {stable_mosaic.version = 11 : i64} {
  func.func @mlp_kernel(%arg0: memref<1xi32, #tpu.memory_space<smem>>, %arg1: memref<8x8xi32, #tpu.memory_space<vmem>>, %arg2: memref<64x128xf32, #tpu.memory_space<vmem>>, %arg3: memref<128x256xf32, #tpu.memory_space<vmem>>, %arg4: memref<1x256xf32, #tpu.memory_space<vmem>>, %arg5: memref<256x128xf32, #tpu.memory_space<vmem>>, %arg6: memref<1x128xf32, #tpu.memory_space<vmem>>, %arg7: memref<128x128xf32, #tpu.memory_space<vmem>>, %arg8: memref<1x128xf32, #tpu.memory_space<vmem>>, %arg9: memref<8x128xf32, #tpu.memory_space<vmem>>) attributes {dimension_semantics = [], scalar_prefetch = 0 : i64, scratch_operands = 0 : i64, tpu.core_type = #tpu.core_type<tc>} {
    %c0 = arith.constant 0 : index
    %0 = memref.load %arg0[%c0] : memref<1xi32, #tpu.memory_space<smem>>
    %c0_0 = arith.constant 0 : index
    %c0_1 = arith.constant 0 : index
    %1 = vector.load %arg1[%c0_0, %c0_1] : memref<8x8xi32, #tpu.memory_space<vmem>>, vector<8x8xi32>
    %2 = tpu.iota {dimensions = array<i32: 1>} : vector<8x64xi32>
    %cst = arith.constant 0.000000e+00 : f32
    %3 = vector.broadcast %cst : f32 to vector<8x64xf32>
    %4 = vector.extract_strided_slice %1 {offsets = [0, 0], sizes = [8, 1], strides = [1, 1]} : vector<8x8xi32> to vector<8x1xi32>
    %5 = vector.broadcast %4 : vector<8x1xi32> to vector<8x64xi32>
    %6 = arith.cmpi eq, %5, %2 : vector<8x64xi32>
    %7 = arith.extui %6 : vector<8x64xi1> to vector<8x64xi32>
    %8 = arith.sitofp %7 : vector<8x64xi32> to vector<8x64xf32>
    %9 = arith.addf %3, %8 : vector<8x64xf32>
    %10 = vector.extract_strided_slice %1 {offsets = [0, 1], sizes = [8, 1], strides = [1, 1]} : vector<8x8xi32> to vector<8x1xi32>
    %11 = vector.broadcast %10 : vector<8x1xi32> to vector<8x64xi32>
    %12 = arith.cmpi eq, %11, %2 : vector<8x64xi32>
    %13 = arith.extui %12 : vector<8x64xi1> to vector<8x64xi32>
    %14 = arith.sitofp %13 : vector<8x64xi32> to vector<8x64xf32>
    %15 = arith.addf %9, %14 : vector<8x64xf32>
    %16 = vector.extract_strided_slice %1 {offsets = [0, 2], sizes = [8, 1], strides = [1, 1]} : vector<8x8xi32> to vector<8x1xi32>
    %17 = vector.broadcast %16 : vector<8x1xi32> to vector<8x64xi32>
    %18 = arith.cmpi eq, %17, %2 : vector<8x64xi32>
    %19 = arith.extui %18 : vector<8x64xi1> to vector<8x64xi32>
    %20 = arith.sitofp %19 : vector<8x64xi32> to vector<8x64xf32>
    %21 = arith.addf %15, %20 : vector<8x64xf32>
    %22 = vector.extract_strided_slice %1 {offsets = [0, 3], sizes = [8, 1], strides = [1, 1]} : vector<8x8xi32> to vector<8x1xi32>
    %23 = vector.broadcast %22 : vector<8x1xi32> to vector<8x64xi32>
    %24 = arith.cmpi eq, %23, %2 : vector<8x64xi32>
    %25 = arith.extui %24 : vector<8x64xi1> to vector<8x64xi32>
    %26 = arith.sitofp %25 : vector<8x64xi32> to vector<8x64xf32>
    %27 = arith.addf %21, %26 : vector<8x64xf32>
    %28 = vector.extract_strided_slice %1 {offsets = [0, 4], sizes = [8, 1], strides = [1, 1]} : vector<8x8xi32> to vector<8x1xi32>
    %29 = vector.broadcast %28 : vector<8x1xi32> to vector<8x64xi32>
    %30 = arith.cmpi eq, %29, %2 : vector<8x64xi32>
    %31 = arith.extui %30 : vector<8x64xi1> to vector<8x64xi32>
    %32 = arith.sitofp %31 : vector<8x64xi32> to vector<8x64xf32>
    %33 = arith.addf %27, %32 : vector<8x64xf32>
    %34 = vector.extract_strided_slice %1 {offsets = [0, 5], sizes = [8, 1], strides = [1, 1]} : vector<8x8xi32> to vector<8x1xi32>
    %35 = vector.broadcast %34 : vector<8x1xi32> to vector<8x64xi32>
    %36 = arith.cmpi eq, %35, %2 : vector<8x64xi32>
    %37 = arith.extui %36 : vector<8x64xi1> to vector<8x64xi32>
    %38 = arith.sitofp %37 : vector<8x64xi32> to vector<8x64xf32>
    %39 = arith.addf %33, %38 : vector<8x64xf32>
    %40 = vector.extract_strided_slice %1 {offsets = [0, 6], sizes = [8, 1], strides = [1, 1]} : vector<8x8xi32> to vector<8x1xi32>
    %41 = vector.broadcast %40 : vector<8x1xi32> to vector<8x64xi32>
    %42 = arith.cmpi eq, %41, %2 : vector<8x64xi32>
    %43 = arith.extui %42 : vector<8x64xi1> to vector<8x64xi32>
    %44 = arith.sitofp %43 : vector<8x64xi32> to vector<8x64xf32>
    %45 = arith.addf %39, %44 : vector<8x64xf32>
    %46 = vector.extract_strided_slice %1 {offsets = [0, 7], sizes = [8, 1], strides = [1, 1]} : vector<8x8xi32> to vector<8x1xi32>
    %47 = vector.broadcast %46 : vector<8x1xi32> to vector<8x64xi32>
    %48 = arith.cmpi eq, %47, %2 : vector<8x64xi32>
    %49 = arith.extui %48 : vector<8x64xi1> to vector<8x64xi32>
    %50 = arith.sitofp %49 : vector<8x64xi32> to vector<8x64xf32>
    %51 = arith.addf %45, %50 : vector<8x64xf32>
    %cst_2 = arith.constant 1.250000e-01 : f32
    %52 = vector.broadcast %cst_2 : f32 to vector<8x64xf32>
    %53 = arith.mulf %51, %52 : vector<8x64xf32>
    %c0_3 = arith.constant 0 : index
    %c0_4 = arith.constant 0 : index
    %54 = vector.load %arg2[%c0_3, %c0_4] : memref<64x128xf32, #tpu.memory_space<vmem>>, vector<64x128xf32>
    %cst_5 = arith.constant dense<0.000000e+00> : vector<8x128xf32>
    %55 = tpu.matmul %53, %54, %cst_5 {dimension_numbers = #tpu.dot_dimension_numbers<[1], [0], [0], [1], [0, 0, 1, 1], [], []>} : vector<8x64xf32>, vector<64x128xf32>, vector<8x128xf32> -> vector<8x128xf32>
    %56 = arith.truncf %55 : vector<8x128xf32> to vector<8x128xbf16>
    %c0_6 = arith.constant 0 : index
    %c0_7 = arith.constant 0 : index
    %57 = vector.load %arg3[%c0_6, %c0_7] : memref<128x256xf32, #tpu.memory_space<vmem>>, vector<128x256xf32>
    %58 = arith.truncf %57 : vector<128x256xf32> to vector<128x256xbf16>
    %cst_8 = arith.constant dense<0.000000e+00> : vector<8x256xf32>
    %59 = tpu.matmul %56, %58, %cst_8 {dimension_numbers = #tpu.dot_dimension_numbers<[1], [0], [0], [1], [0, 0, 1, 1], [], []>} : vector<8x128xbf16>, vector<128x256xbf16>, vector<8x256xf32> -> vector<8x256xf32>
    %c0_9 = arith.constant 0 : index
    %c0_10 = arith.constant 0 : index
    %60 = vector.load %arg4[%c0_9, %c0_10] : memref<1x256xf32, #tpu.memory_space<vmem>>, vector<1x256xf32>
    %61 = vector.broadcast %60 : vector<1x256xf32> to vector<8x256xf32>
    %62 = arith.addf %59, %61 : vector<8x256xf32>
    %cst_11 = arith.constant 0.000000e+00 : f32
    %63 = vector.broadcast %cst_11 : f32 to vector<8x256xf32>
    %64 = arith.maximumf %62, %63 : vector<8x256xf32>
    %65 = tpu.iota {dimensions = array<i32: 0>} : vector<8x256xi32>
    %66 = tpu.iota {dimensions = array<i32: 1>} : vector<8x256xi32>
    %c256_i32 = arith.constant 256 : i32
    %67 = vector.broadcast %c256_i32 : i32 to vector<8x256xi32>
    %68 = arith.muli %65, %67 : vector<8x256xi32>
    %69 = arith.addi %68, %66 : vector<8x256xi32>
    %c305397761_i32 = arith.constant 305397761 : i32
    %70 = vector.broadcast %c305397761_i32 : i32 to vector<8x256xi32>
    %71 = arith.addi %69, %70 : vector<8x256xi32>
    %c-1640531527_i32 = arith.constant -1640531527 : i32
    %72 = arith.muli %0, %c-1640531527_i32 : i32
    %73 = vector.broadcast %72 : i32 to vector<8x256xi32>
    %74 = arith.addi %71, %73 : vector<8x256xi32>
    %c16_i32 = arith.constant 16 : i32
    %75 = vector.broadcast %c16_i32 : i32 to vector<8x256xi32>
    %76 = arith.shrui %74, %75 : vector<8x256xi32>
    %77 = arith.xori %74, %76 : vector<8x256xi32>
    %c-2048144789_i32 = arith.constant -2048144789 : i32
    %78 = vector.broadcast %c-2048144789_i32 : i32 to vector<8x256xi32>
    %79 = arith.muli %77, %78 : vector<8x256xi32>
    %c13_i32 = arith.constant 13 : i32
    %80 = vector.broadcast %c13_i32 : i32 to vector<8x256xi32>
    %81 = arith.shrui %79, %80 : vector<8x256xi32>
    %82 = arith.xori %79, %81 : vector<8x256xi32>
    %c-1028477387_i32 = arith.constant -1028477387 : i32
    %83 = vector.broadcast %c-1028477387_i32 : i32 to vector<8x256xi32>
    %84 = arith.muli %82, %83 : vector<8x256xi32>
    %c16_i32_12 = arith.constant 16 : i32
    %85 = vector.broadcast %c16_i32_12 : i32 to vector<8x256xi32>
    %86 = arith.shrui %84, %85 : vector<8x256xi32>
    %87 = arith.xori %84, %86 : vector<8x256xi32>
    %c2147483647_i32 = arith.constant 2147483647 : i32
    %88 = vector.broadcast %c2147483647_i32 : i32 to vector<8x256xi32>
    %89 = arith.andi %87, %88 : vector<8x256xi32>
    %c1503238553_i32 = arith.constant 1503238553 : i32
    %90 = vector.broadcast %c1503238553_i32 : i32 to vector<8x256xi32>
    %91 = arith.cmpi slt, %89, %90 : vector<8x256xi32>
    %cst_13 = arith.constant 1.42857146 : f32
    %92 = vector.broadcast %cst_13 : f32 to vector<8x256xf32>
    %93 = arith.mulf %64, %92 : vector<8x256xf32>
    %cst_14 = arith.constant 0.000000e+00 : f32
    %94 = vector.broadcast %cst_14 : f32 to vector<8x256xf32>
    %95 = arith.select %91, %93, %94 : vector<8x256xi1>, vector<8x256xf32>
    %96 = arith.truncf %95 : vector<8x256xf32> to vector<8x256xbf16>
    %c0_15 = arith.constant 0 : index
    %c0_16 = arith.constant 0 : index
    %97 = vector.load %arg5[%c0_15, %c0_16] : memref<256x128xf32, #tpu.memory_space<vmem>>, vector<256x128xf32>
    %98 = arith.truncf %97 : vector<256x128xf32> to vector<256x128xbf16>
    %cst_17 = arith.constant dense<0.000000e+00> : vector<8x128xf32>
    %99 = tpu.matmul %96, %98, %cst_17 {dimension_numbers = #tpu.dot_dimension_numbers<[1], [0], [0], [1], [0, 0, 1, 1], [], []>} : vector<8x256xbf16>, vector<256x128xbf16>, vector<8x128xf32> -> vector<8x128xf32>
    %c0_18 = arith.constant 0 : index
    %c0_19 = arith.constant 0 : index
    %100 = vector.load %arg6[%c0_18, %c0_19] : memref<1x128xf32, #tpu.memory_space<vmem>>, vector<1x128xf32>
    %101 = vector.broadcast %100 : vector<1x128xf32> to vector<8x128xf32>
    %102 = arith.addf %99, %101 : vector<8x128xf32>
    %cst_20 = arith.constant 0.000000e+00 : f32
    %103 = vector.broadcast %cst_20 : f32 to vector<8x128xf32>
    %104 = arith.maximumf %102, %103 : vector<8x128xf32>
    %105 = tpu.iota {dimensions = array<i32: 0>} : vector<8x128xi32>
    %106 = tpu.iota {dimensions = array<i32: 1>} : vector<8x128xi32>
    %c128_i32 = arith.constant 128 : i32
    %107 = vector.broadcast %c128_i32 : i32 to vector<8x128xi32>
    %108 = arith.muli %105, %107 : vector<8x128xi32>
    %109 = arith.addi %108, %106 : vector<8x128xi32>
    %c305397762_i32 = arith.constant 305397762 : i32
    %110 = vector.broadcast %c305397762_i32 : i32 to vector<8x128xi32>
    %111 = arith.addi %109, %110 : vector<8x128xi32>
    %c-1640531527_i32_21 = arith.constant -1640531527 : i32
    %112 = arith.muli %0, %c-1640531527_i32_21 : i32
    %113 = vector.broadcast %112 : i32 to vector<8x128xi32>
    %114 = arith.addi %111, %113 : vector<8x128xi32>
    %c16_i32_22 = arith.constant 16 : i32
    %115 = vector.broadcast %c16_i32_22 : i32 to vector<8x128xi32>
    %116 = arith.shrui %114, %115 : vector<8x128xi32>
    %117 = arith.xori %114, %116 : vector<8x128xi32>
    %c-2048144789_i32_23 = arith.constant -2048144789 : i32
    %118 = vector.broadcast %c-2048144789_i32_23 : i32 to vector<8x128xi32>
    %119 = arith.muli %117, %118 : vector<8x128xi32>
    %c13_i32_24 = arith.constant 13 : i32
    %120 = vector.broadcast %c13_i32_24 : i32 to vector<8x128xi32>
    %121 = arith.shrui %119, %120 : vector<8x128xi32>
    %122 = arith.xori %119, %121 : vector<8x128xi32>
    %c-1028477387_i32_25 = arith.constant -1028477387 : i32
    %123 = vector.broadcast %c-1028477387_i32_25 : i32 to vector<8x128xi32>
    %124 = arith.muli %122, %123 : vector<8x128xi32>
    %c16_i32_26 = arith.constant 16 : i32
    %125 = vector.broadcast %c16_i32_26 : i32 to vector<8x128xi32>
    %126 = arith.shrui %124, %125 : vector<8x128xi32>
    %127 = arith.xori %124, %126 : vector<8x128xi32>
    %c2147483647_i32_27 = arith.constant 2147483647 : i32
    %128 = vector.broadcast %c2147483647_i32_27 : i32 to vector<8x128xi32>
    %129 = arith.andi %127, %128 : vector<8x128xi32>
    %c1503238553_i32_28 = arith.constant 1503238553 : i32
    %130 = vector.broadcast %c1503238553_i32_28 : i32 to vector<8x128xi32>
    %131 = arith.cmpi slt, %129, %130 : vector<8x128xi32>
    %cst_29 = arith.constant 1.42857146 : f32
    %132 = vector.broadcast %cst_29 : f32 to vector<8x128xf32>
    %133 = arith.mulf %104, %132 : vector<8x128xf32>
    %cst_30 = arith.constant 0.000000e+00 : f32
    %134 = vector.broadcast %cst_30 : f32 to vector<8x128xf32>
    %135 = arith.select %131, %133, %134 : vector<8x128xi1>, vector<8x128xf32>
    %136 = arith.truncf %135 : vector<8x128xf32> to vector<8x128xbf16>
    %c0_31 = arith.constant 0 : index
    %c0_32 = arith.constant 0 : index
    %137 = vector.load %arg7[%c0_31, %c0_32] : memref<128x128xf32, #tpu.memory_space<vmem>>, vector<128x128xf32>
    %138 = arith.truncf %137 : vector<128x128xf32> to vector<128x128xbf16>
    %cst_33 = arith.constant dense<0.000000e+00> : vector<8x128xf32>
    %139 = tpu.matmul %136, %138, %cst_33 {dimension_numbers = #tpu.dot_dimension_numbers<[1], [0], [0], [1], [0, 0, 1, 1], [], []>} : vector<8x128xbf16>, vector<128x128xbf16>, vector<8x128xf32> -> vector<8x128xf32>
    %c0_34 = arith.constant 0 : index
    %c0_35 = arith.constant 0 : index
    %140 = vector.load %arg8[%c0_34, %c0_35] : memref<1x128xf32, #tpu.memory_space<vmem>>, vector<1x128xf32>
    %141 = vector.broadcast %140 : vector<1x128xf32> to vector<8x128xf32>
    %142 = arith.addf %139, %141 : vector<8x128xf32>
    %c0_36 = arith.constant 0 : index
    %c0_37 = arith.constant 0 : index
    %143 = vector.load %arg9[%c0_36, %c0_37] : memref<8x128xf32, #tpu.memory_space<vmem>>, vector<8x128xf32>
    tpu.vector_store %arg9[%c0_36, %c0_37], %142 {strides = array<i32>} : memref<8x128xf32, #tpu.memory_space<vmem>>, vector<8x128xf32>,
    return
  }
}

</mosaic_0001>

<llo_original>
// kernel: mlp_classifier_forward.1
$region0: #{mlp_classifier_forward.1}
  #allocation0 [shape = 'u32[]', space=smem, size = 0x4, offset = 0x4, fixed_abs, tag = 'smem constant byte address 0x4 - core index']
  #allocation1 [shape = 'u32[144,128]{1,0:T(1,128)}', space=vmem, size = 0x12000, scoped, tag = 'internal scratch']
  #allocation2 [shape = 's32[1]{0:T(128)S(6)}', space=smem, size = 0x200, scoped, tag = 'scoped memory for mlp_classifier_forward.1']
  %s0 = inlined_call_operand.<no memory space> [shape: s32[1], index: 0, kind: input, shape index: {}]
  %s1 = inlined_call_operand.hbm [shape: s32[8,8], index: 1, kind: input, shape index: {}]
  %s2 = inlined_call_operand.hbm [shape: f32[64,128], index: 2, kind: input, shape index: {}]
  %s3 = inlined_call_operand.hbm [shape: f32[128,256], index: 3, kind: input, shape index: {}]
  %s4 = inlined_call_operand.vmem [shape: f32[1,256], index: 4, kind: input, shape index: {}]
  %s5 = inlined_call_operand.hbm [shape: f32[256,128], index: 5, kind: input, shape index: {}]
  %s6 = inlined_call_operand.vmem [shape: f32[1,128], index: 6, kind: input, shape index: {}]
  %s7 = inlined_call_operand.hbm [shape: f32[128,128], index: 7, kind: input, shape index: {}]
  %s8 = inlined_call_operand.vmem [shape: f32[1,128], index: 8, kind: input, shape index: {}]
  %s9 = inlined_call_operand.hbm [shape: f32[8,128], index: 9, kind: output, shape index: {}]
  %s10 = sld [smem:[#allocation0]]
  $region66: #{mlp_classifier_forward.1} parent=0
    _
  %s12 = ssub.s32 1, %s10
  %s13 = scalar_select 0, %s12, %s10
  %14 = sst [smem:[#allocation2]] %s0
  $region1: #{mlp_classifier_forward.1} parent=0
    #allocation3 [shape = 'u8[4096]{0}', space=vmem, size = 0x1000, scoped, tag = 'input window, operand 1, single buffered']
    #allocation4 [shape = 's32[1]{0}', space=sflag, size = 0x4, scoped, tag = 'scoped memory for mlp_classifier_forward.1']
    #allocation5 [shape = 's32[1]{0}', space=sflag, size = 0x4, scoped, tag = 'scoped memory for mlp_classifier_forward.1']
    #allocation6 [shape = 'u8[32768]{0}', space=vmem, size = 0x8000, scoped, tag = 'input window, operand 2, single buffered']
    #allocation7 [shape = 's32[1]{0}', space=sflag, size = 0x4, scoped, tag = 'scoped memory for mlp_classifier_forward.1']
    #allocation8 [shape = 'u8[131072]{0}', space=vmem, size = 0x20000, scoped, tag = 'input window, operand 3, single buffered']
    #allocation9 [shape = 'u8[131072]{0}', space=vmem, size = 0x20000, scoped, tag = 'input window, operand 5, single buffered']
    #allocation10 [shape = 's32[1]{0}', space=sflag, size = 0x4, scoped, tag = 'scoped memory for mlp_classifier_forward.1']
    #allocation11 [shape = 'u8[65536]{0}', space=vmem, size = 0x10000, scoped, tag = 'input window, operand 7, single buffered']
    #allocation12 [shape = 'u8[4096]{0}', space=vmem, size = 0x1000, scoped, tag = 'output window, operand 0, single buffered']
    %15 = vsyncpa [#allocation4], 0
    %16 = vsyncpa [#allocation7], 0
    %17 = vsyncpa [#allocation10], 0
    %18 = vsyncpa [#allocation5], 0
    // Predicated region
    $region2: #{mlp_classifier_forward.1} parent=1 // pred_check
      _
    $region3: #{mlp_classifier_forward.1} parent=1 // pred_check_branch
      %20 = sbr.rel (0) target = $region5
    $region4: #{mlp_classifier_forward.1} parent=1 // pred_region
      _
    $region5: #{mlp_classifier_forward.1} parent=1 // pred_fallthru
      _
    // Predicated region
    $region6: #{mlp_classifier_forward.1} parent=1 // pred_check
      _
    $region7: #{mlp_classifier_forward.1} parent=1 // pred_check_branch
      %22 = sbr.rel (0) target = $region9
    $region8: #{mlp_classifier_forward.1} parent=1 // pred_region
      %s24 = ssub.s32 128, 128
      %25 = vsyncadd [#allocation4], %s24
      %s27 = sshll.u32 [#allocation3], 4
      %s28 = int_to_ptr.vmem [resolvable:$true] %s27
      %30 = dma.hbm_to_vmem [thread:$0]  %s1, 128, %s28, [#allocation4]
    $region9: #{mlp_classifier_forward.1} parent=1 // pred_fallthru
      _
    // Predicated region
    $region10: #{mlp_classifier_forward.1} parent=1 // pred_check
      _
    $region11: #{mlp_classifier_forward.1} parent=1 // pred_check_branch
      %32 = sbr.rel (0) target = $region13
    $region12: #{mlp_classifier_forward.1} parent=1 // pred_region
      %s34 = ssub.s32 1024, 1024
      %35 = vsyncadd [#allocation7], %s34
      %s36 = sshll.u32 [#allocation6], 4
      %s37 = int_to_ptr.vmem [resolvable:$true] %s36
      %42 = dma.hbm_to_vmem [thread:$0]  %s2, 1024, %s37, [#allocation7], 128, 128, 8
    $region13: #{mlp_classifier_forward.1} parent=1 // pred_fallthru
      _
    // Predicated region
    $region14: #{mlp_classifier_forward.1} parent=1 // pred_check
      _
    $region15: #{mlp_classifier_forward.1} parent=1 // pred_check_branch
      %44 = sbr.rel (0) target = $region17
    $region16: #{mlp_classifier_forward.1} parent=1 // pred_region
      %s46 = ssub.s32 4096, 4096
      %47 = vsyncadd [#allocation7], %s46
      %s48 = sshll.u32 [#allocation8], 4
      %s49 = int_to_ptr.vmem [resolvable:$true] %s48
      %54 = dma.hbm_to_vmem [thread:$0]  %s3, 4096, %s49, [#allocation7], 256, 256, 16
    $region17: #{mlp_classifier_forward.1} parent=1 // pred_fallthru
      _
    // Predicated region
    $region18: #{mlp_classifier_forward.1} parent=1 // pred_check
      _
    $region19: #{mlp_classifier_forward.1} parent=1 // pred_check_branch
      %56 = sbr.rel (0) target = $region21
    $region20: #{mlp_classifier_forward.1} parent=1 // pred_region
      _
    $region21: #{mlp_classifier_forward.1} parent=1 // pred_fallthru
      _
    // Predicated region
    $region22: #{mlp_classifier_forward.1} parent=1 // pred_check
      _
    $region23: #{mlp_classifier_forward.1} parent=1 // pred_check_branch
      %58 = sbr.rel (0) target = $region25
    $region24: #{mlp_classifier_forward.1} parent=1 // pred_region
      %s60 = ssub.s32 4096, 4096
      %61 = vsyncadd [#allocation10], %s60
      %s62 = sshll.u32 [#allocation9], 4
      %s63 = int_to_ptr.vmem [resolvable:$true] %s62
      %68 = dma.hbm_to_vmem [thread:$0]  %s5, 4096, %s63, [#allocation10], 128, 128, 8
    $region25: #{mlp_classifier_forward.1} parent=1 // pred_fallthru
      _
    // Predicated region
    $region26: #{mlp_classifier_forward.1} parent=1 // pred_check
      _
    $region27: #{mlp_classifier_forward.1} parent=1 // pred_check_branch
      %70 = sbr.rel (0) target = $region29
    $region28: #{mlp_classifier_forward.1} parent=1 // pred_region
      _
    $region29: #{mlp_classifier_forward.1} parent=1 // pred_fallthru
      _
    // Predicated region
    $region30: #{mlp_classifier_forward.1} parent=1 // pred_check
      _
    $region31: #{mlp_classifier_forward.1} parent=1 // pred_check_branch
      %72 = sbr.rel (0) target = $region33
    $region32: #{mlp_classifier_forward.1} parent=1 // pred_region
      %s74 = ssub.s32 2048, 2048
      %75 = vsyncadd [#allocation10], %s74
      %s76 = sshll.u32 [#allocation11], 4
      %s77 = int_to_ptr.vmem [resolvable:$true] %s76
      %82 = dma.hbm_to_vmem [thread:$0]  %s7, 2048, %s77, [#allocation10], 128, 128, 8
    $region33: #{mlp_classifier_forward.1} parent=1 // pred_fallthru
      _
    // Predicated region
    $region34: #{mlp_classifier_forward.1} parent=1 // pred_check
      _
    $region35: #{mlp_classifier_forward.1} parent=1 // pred_check_branch
      %84 = sbr.rel (0) target = $region37
    $region36: #{mlp_classifier_forward.1} parent=1 // pred_region
      _
    $region37: #{mlp_classifier_forward.1} parent=1 // pred_fallthru
      _
    // Predicated region
    $region38: #{mlp_classifier_forward.1} parent=1 // pred_check
      _
    $region39: #{mlp_classifier_forward.1} parent=1 // pred_check_branch
      %86 = sbr.rel (0) target = $region41
    $region40: #{mlp_classifier_forward.1} parent=1 // pred_region
      %87 = dma.done [#allocation4], 128
    $region41: #{mlp_classifier_forward.1} parent=1 // pred_fallthru
      _
    // Predicated region
    $region42: #{mlp_classifier_forward.1} parent=1 // pred_check
      _
    $region43: #{mlp_classifier_forward.1} parent=1 // pred_check_branch
      %89 = sbr.rel (0) target = $region45
    $region44: #{mlp_classifier_forward.1} parent=1 // pred_region
      %90 = dma.done [#allocation7], 1024
    $region45: #{mlp_classifier_forward.1} parent=1 // pred_fallthru
      _
    // Predicated region
    $region46: #{mlp_classifier_forward.1} parent=1 // pred_check
      _
    $region47: #{mlp_classifier_forward.1} parent=1 // pred_check_branch
      %92 = sbr.rel (0) target = $region49
    $region48: #{mlp_classifier_forward.1} parent=1 // pred_region
      %93 = dma.done [#allocation7], 4096
    $region49: #{mlp_classifier_forward.1} parent=1 // pred_fallthru
      _
    // Predicated region
    $region50: #{mlp_classifier_forward.1} parent=1 // pred_check
      _
    $region51: #{mlp_classifier_forward.1} parent=1 // pred_check_branch
      %95 = sbr.rel (0) target = $region53
    $region52: #{mlp_classifier_forward.1} parent=1 // pred_region
      %96 = dma.done [#allocation10], 4096
    $region53: #{mlp_classifier_forward.1} parent=1 // pred_fallthru
      _
    // Predicated region
    $region54: #{mlp_classifier_forward.1} parent=1 // pred_check
      _
    $region55: #{mlp_classifier_forward.1} parent=1 // pred_check_branch
      %98 = sbr.rel (0) target = $region57
    $region56: #{mlp_classifier_forward.1} parent=1 // pred_region
      %99 = dma.done [#allocation10], 2048
    $region57: #{mlp_classifier_forward.1} parent=1 // pred_fallthru
      _
    %s101 = sld [smem:[#allocation2]]
    %v102 = vld [vmem:[#allocation3] sm:$0xff]
    %v103 = vlaneseq
    %v104 = vand.u32 %v103, 127
    %105 = vset.pattern.permute.xlu0 0
    %106 = vperm.xlu0 %105, %v102
    %v107 = vpop.permute.xlu0 %106
    %vm108 = vcmp.eq.s32.totalorder %v107, %v104
    %v109 = vsel %vm108, 1, 0
    %v110 = vcvt.s32.f32 %v109
    %v111 = vadd.f32 %v110, 0.0
    %112 = vset.pattern.permute.xlu0 1
    %113 = vperm.xlu0 %112, %v102
    %v114 = vpop.permute.xlu0 %113
    %vm115 = vcmp.eq.s32.totalorder %v114, %v104
    %v116 = vsel %vm115, 1, 0
    %v117 = vcvt.s32.f32 %v116
    %v118 = vadd.f32 %v111, %v117
    %119 = vset.pattern.permute.xlu0 2
    %120 = vperm.xlu0 %119, %v102
    %v121 = vpop.permute.xlu0 %120
    %vm122 = vcmp.eq.s32.totalorder %v121, %v104
    %v123 = vsel %vm122, 1, 0
    %v124 = vcvt.s32.f32 %v123
    %v125 = vadd.f32 %v118, %v124
    %126 = vset.pattern.permute.xlu0 3
    %127 = vperm.xlu0 %126, %v102
    %v128 = vpop.permute.xlu0 %127
    %vm129 = vcmp.eq.s32.totalorder %v128, %v104
    %v130 = vsel %vm129, 1, 0
    %v131 = vcvt.s32.f32 %v130
    %v132 = vadd.f32 %v125, %v131
    %133 = vset.pattern.permute.xlu0 4
    %134 = vperm.xlu0 %133, %v102
    %v135 = vpop.permute.xlu0 %134
    %vm136 = vcmp.eq.s32.totalorder %v135, %v104
    %v137 = vsel %vm136, 1, 0
    %v138 = vcvt.s32.f32 %v137
    %v139 = vadd.f32 %v132, %v138
    %140 = vset.pattern.permute.xlu0 5
    %141 = vperm.xlu0 %140, %v102
    %v142 = vpop.permute.xlu0 %141
    %vm143 = vcmp.eq.s32.totalorder %v142, %v104
    %v144 = vsel %vm143, 1, 0
    %v145 = vcvt.s32.f32 %v144
    %v146 = vadd.f32 %v139, %v145
    %147 = vset.pattern.permute.xlu0 6
    %148 = vperm.xlu0 %147, %v102
    %v149 = vpop.permute.xlu0 %148
    %vm150 = vcmp.eq.s32.totalorder %v149, %v104
    %v151 = vsel %vm150, 1, 0
    %v152 = vcvt.s32.f32 %v151
    %v153 = vadd.f32 %v146, %v152
    %154 = vset.pattern.permute.xlu0 7
    %155 = vperm.xlu0 %154, %v102
    %v156 = vpop.permute.xlu0 %155
    %vm157 = vcmp.eq.s32.totalorder %v156, %v104
    %v158 = vsel %vm157, 1, 0
    %v159 = vcvt.s32.f32 %v158
    %v160 = vadd.f32 %v153, %v159
    %v161 = vmul.f32 %v160, 0.125
    %v162 = vld [vmem:[#allocation6] sm:$0xff]
    %v163 = vld [vmem:[#allocation6 + $0x8] sm:$0xff]
    %v164 = vld [vmem:[#allocation6 + $0x10] sm:$0xff]
    %v165 = vld [vmem:[#allocation6 + $0x18] sm:$0xff]
    %v166 = vld [vmem:[#allocation6 + $0x20] sm:$0xff]
    %v167 = vld [vmem:[#allocation6 + $0x28] sm:$0xff]
    %v168 = vld [vmem:[#allocation6 + $0x30] sm:$0xff]
    %v169 = vld [vmem:[#allocation6 + $0x38] sm:$0xff]
    %vm170 = vcmask 523264
    %v172 = vsel %vm170, %v161, 0
    %174 = vmatprep.subr.mxu0 0.0
    %175 = vmatpush1.msra.mxu0 %v162
    %176 = vmatprep.subr.mxu0 0.0
    %177 = vmatpush1.msra.mxu0 %v163
    %178 = vmatprep.subr.mxu0 0.0
    %179 = vmatpush1.msra.mxu0 %v164
    %180 = vmatprep.subr.mxu0 0.0
    %181 = vmatpush1.msra.mxu0 %v165
    %182 = vmatprep.subr.mxu0 0.0
    %183 = vmatpush1.msra.mxu0 %v166
    %184 = vmatprep.subr.mxu0 0.0
    %185 = vmatpush1.msra.mxu0 %v167
    %186 = vmatprep.subr.mxu0 0.0
    %187 = vmatpush1.msra.mxu0 %v168
    %188 = vmatprep.subr.mxu0 0.0
    %189 = vmatpush1.msra.mxu0 %v169
    %190 = vmatprep.subr.mxu0 0.0
    %191 = vmatpush1.msra.mxu0 0.0
    %192 = vmatprep.subr.mxu0 0.0
    %193 = vmatpush1.msra.mxu0 0.0
    %194 = vmatprep.subr.mxu0 0.0
    %195 = vmatpush1.msra.mxu0 0.0
    %196 = vmatprep.subr.mxu0 0.0
    %197 = vmatpush1.msra.mxu0 0.0
    %198 = vmatprep.subr.mxu0 0.0
    %199 = vmatpush1.msra.mxu0 0.0
    %200 = vmatprep.subr.mxu0 0.0
    %201 = vmatpush1.msra.mxu0 0.0
    %202 = vmatprep.subr.mxu0 0.0
    %203 = vmatpush1.msra.mxu0 0.0
    %204 = vmatprep.subr.mxu0 0.0
    %205 = vmatpush1.msra.mxu0 0.0
    %206 = vmatprep.subr.mxu0 0.0
    %207 = vmatpush1.msra.mxu0 0.0
    %208 = vmatprep.subr.mxu0 0.0
    %209 = vmatpush1.msra.mxu0 0.0
    %210 = vmatprep.subr.mxu0 0.0
    %211 = vmatpush1.msra.mxu0 0.0
    %212 = vmatprep.subr.mxu0 0.0
    %213 = vmatpush1.msra.mxu0 0.0
    %214 = vmatprep.subr.mxu0 0.0
    %215 = vmatpush1.msra.mxu0 0.0
    %216 = vmatprep.subr.mxu0 0.0
    %217 = vmatpush1.msra.mxu0 0.0
    %218 = vmatprep.subr.mxu0 0.0
    %219 = vmatpush1.msra.mxu0 0.0
    %220 = vmatprep.subr.mxu0 0.0
    %221 = vmatpush1.msra.mxu0 0.0
    %222 = vmatprep.subr.mxu0 0.0
    %223 = vmatpush1.msra.mxu0 0.0
    %224 = vmatprep.subr.mxu0 0.0
    %225 = vmatpush1.msra.mxu0 0.0
    %226 = vmatprep.subr.mxu0 0.0
    %227 = vmatpush1.msra.mxu0 0.0
    %228 = vmatprep.subr.mxu0 0.0
    %229 = vmatpush1.msra.mxu0 0.0
    %230 = vmatprep.subr.mxu0 0.0
    %231 = vmatpush1.msra.mxu0 0.0
    %232 = vmatprep.subr.mxu0 0.0
    %233 = vmatpush1.msra.mxu0 0.0
    %234 = vmatprep.subr.mxu0 0.0
    %235 = vmatpush1.msra.mxu0 0.0
    %236 = vmatprep.subr.mxu0 0.0
    %237 = vmatpush1.msra.mxu0 0.0
    %238 = vmatprep.mubr.f32.mxu0 0.0
    %239 = vmatmul.mubr.f32.gmra.mrb[0].mxu0 %v172
    %v240 = vpop.f32.mrb[0].mxu0
    %v241 = vadd.f32 0.0, %v240
    %v242 = vpop.f32.mrb[0].mxu0
    %243 = vdwg.mxu0
    %v244 = vpack.c.bf16 %v241, %v241
    %v245 = vld [vmem:[#allocation8] sm:$0xff]
    %v246 = vld [vmem:[#allocation8 + $0x8] sm:$0xff]
    %v247 = vld [vmem:[#allocation8 + $0x10] sm:$0xff]
    %v248 = vld [vmem:[#allocation8 + $0x18] sm:$0xff]
    %v249 = vld [vmem:[#allocation8 + $0x20] sm:$0xff]
    %v250 = vld [vmem:[#allocation8 + $0x28] sm:$0xff]
    %v251 = vld [vmem:[#allocation8 + $0x30] sm:$0xff]
    %v252 = vld [vmem:[#allocation8 + $0x38] sm:$0xff]
    %v253 = vld [vmem:[#allocation8 + $0x40] sm:$0xff]
    %v254 = vld [vmem:[#allocation8 + $0x48] sm:$0xff]
    %v255 = vld [vmem:[#allocation8 + $0x50] sm:$0xff]
    %v256 = vld [vmem:[#allocation8 + $0x58] sm:$0xff]
    %v257 = vld [vmem:[#allocation8 + $0x60] sm:$0xff]
    %v258 = vld [vmem:[#allocation8 + $0x68] sm:$0xff]
    %v259 = vld [vmem:[#allocation8 + $0x70] sm:$0xff]
    %v260 = vld [vmem:[#allocation8 + $0x78] sm:$0xff]
    %v261 = vld [vmem:[#allocation8 + $0x80] sm:$0xff]
    %v262 = vld [vmem:[#allocation8 + $0x88] sm:$0xff]
    %v263 = vld [vmem:[#allocation8 + $0x90] sm:$0xff]
    %v264 = vld [vmem:[#allocation8 + $0x98] sm:$0xff]
    %v265 = vld [vmem:[#allocation8 + $0xa0] sm:$0xff]
    %v266 = vld [vmem:[#allocation8 + $0xa8] sm:$0xff]
    %v267 = vld [vmem:[#allocation8 + $0xb0] sm:$0xff]
    %v268 = vld [vmem:[#allocation8 + $0xb8] sm:$0xff]
    %v269 = vld [vmem:[#allocation8 + $0xc0] sm:$0xff]
    %v270 = vld [vmem:[#allocation8 + $0xc8] sm:$0xff]
    %v271 = vld [vmem:[#allocation8 + $0xd0] sm:$0xff]
    %v272 = vld [vmem:[#allocation8 + $0xd8] sm:$0xff]
    %v273 = vld [vmem:[#allocation8 + $0xe0] sm:$0xff]
    %v274 = vld [vmem:[#allocation8 + $0xe8] sm:$0xff]
    %v275 = vld [vmem:[#allocation8 + $0xf0] sm:$0xff]
    %v276 = vld [vmem:[#allocation8 + $0xf8] sm:$0xff]
    %v277 = vpack.c.bf16 %v247, %v245
    %v278 = vpack.c.bf16 %v248, %v246
    %v279 = vpack.c.bf16 %v251, %v249
    %v280 = vpack.c.bf16 %v252, %v250
    %v281 = vpack.c.bf16 %v255, %v253
    %v282 = vpack.c.bf16 %v256, %v254
    %v283 = vpack.c.bf16 %v259, %v257
    %v284 = vpack.c.bf16 %v260, %v258
    %v285 = vpack.c.bf16 %v263, %v261
    %v286 = vpack.c.bf16 %v264, %v262
    %v287 = vpack.c.bf16 %v267, %v265
    %v288 = vpack.c.bf16 %v268, %v266
    %v289 = vpack.c.bf16 %v271, %v269
    %v290 = vpack.c.bf16 %v272, %v270
    %v291 = vpack.c.bf16 %v275, %v273
    %v292 = vpack.c.bf16 %v276, %v274
    %v293 = vld [vmem:[%s4] sm:$0x3]
    %v295 = vlaneseq
    %v296 = vshrl.u32 %v295, 7
    %v297 = vsub.s32 0, %v296
    %v298 = vrot.slane %v293, %v297
    %v299 = vlaneseq
    %v300 = vshrl.u32 %v299, 7
    %v301 = vsub.s32 1, %v300
    %v302 = vrot.slane %v293, %v301
    %305 = vmatprep.subr.bf16.mxu0 %v278
    %306 = vmatpush1.bf16.msra.mxu0 %v277
    %307 = vmatprep.subr.bf16.mxu0 %v280
    %308 = vmatpush1.bf16.msra.mxu0 %v279
    %309 = vmatprep.subr.bf16.mxu0 %v282
    %310 = vmatpush1.bf16.msra.mxu0 %v281
    %311 = vmatprep.subr.bf16.mxu0 %v284
    %312 = vmatpush1.bf16.msra.mxu0 %v283
    %313 = vmatprep.subr.bf16.mxu0 %v286
    %314 = vmatpush1.bf16.msra.mxu0 %v285
    %315 = vmatprep.subr.bf16.mxu0 %v288
    %316 = vmatpush1.bf16.msra.mxu0 %v287
    %317 = vmatprep.subr.bf16.mxu0 %v290
    %318 = vmatpush1.bf16.msra.mxu0 %v289
    %319 = vmatprep.subr.bf16.mxu0 %v292
    %320 = vmatpush1.bf16.msra.mxu0 %v291
    %321 = vmatprep.subr.bf16.mxu0 0
    %322 = vmatpush1.bf16.msra.mxu0 0
    %323 = vmatprep.subr.bf16.mxu0 0
    %324 = vmatpush1.bf16.msra.mxu0 0
    %325 = vmatprep.subr.bf16.mxu0 0
    %326 = vmatpush1.bf16.msra.mxu0 0
    %327 = vmatprep.subr.bf16.mxu0 0
    %328 = vmatpush1.bf16.msra.mxu0 0
    %329 = vmatprep.subr.bf16.mxu0 0
    %330 = vmatpush1.bf16.msra.mxu0 0
    %331 = vmatprep.subr.bf16.mxu0 0
    %332 = vmatpush1.bf16.msra.mxu0 0
    %333 = vmatprep.subr.bf16.mxu0 0
    %334 = vmatpush1.bf16.msra.mxu0 0
    %335 = vmatprep.subr.bf16.mxu0 0
    %336 = vmatpush1.bf16.msra.mxu0 0
    %337 = vmatprep.mubr.bf16.mxu0 0
    %338 = vmatmul.mubr.bf16.gmra.mrb[0].mxu0 %v244
    %v339 = vpop.f32.mrb[0].mxu0
    %v340 = vadd.f32 %v298, %v339
    %v341 = vpop.f32.mrb[0].mxu0
    %v342 = vadd.f32 %v302, %v341
    %v343 = vpop.f32.mrb[0].mxu0
    %v344 = vpop.f32.mrb[0].mxu0
    %345 = vdwg.mxu0
    %v346 = vmax.f32 %v340, 0.0
    %v347 = vmax.f32 %v342, 0.0
    %v348 = vlaneseq
    %v349 = vshrl.u32 %v348, 7
    %v350 = vadd.s32 %v104, 128
    %v351 = vmul.u32 %v349, 256
    %v352 = vadd.s32 %v351, %v104
    %v353 = vadd.s32 %v351, %v350
    %v354 = vadd.s32 %v352, 305397761
    %v355 = vadd.s32 %v353, 305397761
    %s356 = smul.u32 %s101, 2654435769
    %v357 = vstv %s356
    %v358 = vadd.s32 %v354, %v357
    %v359 = vadd.s32 %v355, %v357
    %v360 = vshrl.u32 %v358, 16
    %v361 = vshrl.u32 %v359, 16
    %v362 = vxor.u32 %v358, %v360
    %v363 = vxor.u32 %v359, %v361
    %v364 = vmul.u32 %v362, 2246822507
    %v365 = vmul.u32 %v363, 2246822507
    %v366 = vshrl.u32 %v364, 13
    %v367 = vshrl.u32 %v365, 13
    %v368 = vxor.u32 %v364, %v366
    %v369 = vxor.u32 %v365, %v367
    %v370 = vmul.u32 %v368, 3266489909
    %v371 = vmul.u32 %v369, 3266489909
    %v372 = vshrl.u32 %v370, 16
    %v373 = vshrl.u32 %v371, 16
    %v374 = vxor.u32 %v370, %v372
    %v375 = vxor.u32 %v371, %v373
    %v376 = vand.u32 %v374, 2147483647
    %v377 = vand.u32 %v375, 2147483647
    %vm378 = vcmp.lt.s32.totalorder %v376, 1503238553
    %vm379 = vcmp.lt.s32.totalorder %v377, 1503238553
    %v380 = vmul.f32 %v346, 1.4285715
    %v381 = vmul.f32 %v347, 1.4285715
    %v382 = vsel %vm378, %v380, 0.0
    %v383 = vsel %vm379, %v381, 0.0
    %v384 = vpack.c.bf16 %v382, %v382
    %v385 = vpack.c.bf16 %v383, %v383
    %v386 = vld [vmem:[#allocation9] sm:$0xff]
    %v387 = vld [vmem:[#allocation9 + $0x8] sm:$0xff]
    %v388 = vld [vmem:[#allocation9 + $0x10] sm:$0xff]
    %v389 = vld [vmem:[#allocation9 + $0x18] sm:$0xff]
    %v390 = vld [vmem:[#allocation9 + $0x20] sm:$0xff]
    %v391 = vld [vmem:[#allocation9 + $0x28] sm:$0xff]
    %v392 = vld [vmem:[#allocation9 + $0x30] sm:$0xff]
    %v393 = vld [vmem:[#allocation9 + $0x38] sm:$0xff]
    %v394 = vld [vmem:[#allocation9 + $0x40] sm:$0xff]
    %v395 = vld [vmem:[#allocation9 + $0x48] sm:$0xff]
    %v396 = vld [vmem:[#allocation9 + $0x50] sm:$0xff]
    %v397 = vld [vmem:[#allocation9 + $0x58] sm:$0xff]
    %v398 = vld [vmem:[#allocation9 + $0x60] sm:$0xff]
    %v399 = vld [vmem:[#allocation9 + $0x68] sm:$0xff]
    %v400 = vld [vmem:[#allocation9 + $0x70] sm:$0xff]
    %v401 = vld [vmem:[#allocation9 + $0x78] sm:$0xff]
    %v402 = vld [vmem:[#allocation9 + $0x80] sm:$0xff]
    %v403 = vld [vmem:[#allocation9 + $0x88] sm:$0xff]
    %v404 = vld [vmem:[#allocation9 + $0x90] sm:$0xff]
    %v405 = vld [vmem:[#allocation9 + $0x98] sm:$0xff]
    %v406 = vld [vmem:[#allocation9 + $0xa0] sm:$0xff]
    %v407 = vld [vmem:[#allocation9 + $0xa8] sm:$0xff]
    %v408 = vld [vmem:[#allocation9 + $0xb0] sm:$0xff]
    %v409 = vld [vmem:[#allocation9 + $0xb8] sm:$0xff]
    %v410 = vld [vmem:[#allocation9 + $0xc0] sm:$0xff]
    %v411 = vld [vmem:[#allocation9 + $0xc8] sm:$0xff]
    %v412 = vld [vmem:[#allocation9 + $0xd0] sm:$0xff]
    %v413 = vld [vmem:[#allocation9 + $0xd8] sm:$0xff]
    %v414 = vld [vmem:[#allocation9 + $0xe0] sm:$0xff]
    %v415 = vld [vmem:[#allocation9 + $0xe8] sm:$0xff]
    %v416 = vld [vmem:[#allocation9 + $0xf0] sm:$0xff]
    %v417 = vld [vmem:[#allocation9 + $0xf8] sm:$0xff]
    %v418 = vpack.c.bf16 %v387, %v386
    %v419 = vpack.c.bf16 %v389, %v388
    %v420 = vpack.c.bf16 %v391, %v390
    %v421 = vpack.c.bf16 %v393, %v392
    %v422 = vpack.c.bf16 %v395, %v394
    %v423 = vpack.c.bf16 %v397, %v396
    %v424 = vpack.c.bf16 %v399, %v398
    %v425 = vpack.c.bf16 %v401, %v400
    %v426 = vpack.c.bf16 %v403, %v402
    %v427 = vpack.c.bf16 %v405, %v404
    %v428 = vpack.c.bf16 %v407, %v406
    %v429 = vpack.c.bf16 %v409, %v408
    %v430 = vpack.c.bf16 %v411, %v410
    %v431 = vpack.c.bf16 %v413, %v412
    %v432 = vpack.c.bf16 %v415, %v414
    %v433 = vpack.c.bf16 %v417, %v416
    %v434 = vld [vmem:[%s6] sm:$0x1]
    %v436 = vlaneseq
    %v437 = vshrl.u32 %v436, 7
    %v438 = vsub.s32 0, %v437
    %v439 = vrot.slane %v434, %v438
    %441 = vmatprep.subr.bf16.mxu0 0
    %442 = vmatpush1.bf16.msra.mxu0 %v418
    %443 = vmatprep.subr.bf16.mxu0 0
    %444 = vmatpush1.bf16.msra.mxu0 %v419
    %445 = vmatprep.subr.bf16.mxu0 0
    %446 = vmatpush1.bf16.msra.mxu0 %v420
    %447 = vmatprep.subr.bf16.mxu0 0
    %448 = vmatpush1.bf16.msra.mxu0 %v421
    %449 = vmatprep.subr.bf16.mxu0 0
    %450 = vmatpush1.bf16.msra.mxu0 %v422
    %451 = vmatprep.subr.bf16.mxu0 0
    %452 = vmatpush1.bf16.msra.mxu0 %v423
    %453 = vmatprep.subr.bf16.mxu0 0
    %454 = vmatpush1.bf16.msra.mxu0 %v424
    %455 = vmatprep.subr.bf16.mxu0 0
    %456 = vmatpush1.bf16.msra.mxu0 %v425
    %457 = vmatprep.subr.bf16.mxu0 0
    %458 = vmatpush1.bf16.msra.mxu0 %v426
    %459 = vmatprep.subr.bf16.mxu0 0
    %460 = vmatpush1.bf16.msra.mxu0 %v427
    %461 = vmatprep.subr.bf16.mxu0 0
    %462 = vmatpush1.bf16.msra.mxu0 %v428
    %463 = vmatprep.subr.bf16.mxu0 0
    %464 = vmatpush1.bf16.msra.mxu0 %v429
    %465 = vmatprep.subr.bf16.mxu0 0
    %466 = vmatpush1.bf16.msra.mxu0 %v430
    %467 = vmatprep.subr.bf16.mxu0 0
    %468 = vmatpush1.bf16.msra.mxu0 %v431
    %469 = vmatprep.subr.bf16.mxu0 0
    %470 = vmatpush1.bf16.msra.mxu0 %v432
    %471 = vmatprep.subr.bf16.mxu0 0
    %472 = vmatpush1.bf16.msra.mxu0 %v433
    %473 = vmatprep.mubr.bf16.mxu0 %v385
    %474 = vmatmul.mubr.bf16.gmra.mrb[0].mxu0 %v384
    %v475 = vpop.f32.mrb[0].mxu0
    %v476 = vadd.f32 %v439, %v475
    %v477 = vpop.f32.mrb[0].mxu0
    %v478 = vpop.f32.mrb[0].mxu0
    %v479 = vpop.f32.mrb[0].mxu0
    %480 = vdwg.mxu0
    %v481 = vmax.f32 %v476, 0.0
    %v482 = vmul.u32 %v349, 128
    %v483 = vadd.s32 %v482, %v104
    %v484 = vadd.s32 %v483, 305397762
    %v485 = vadd.s32 %v484, %v357
    %v486 = vshrl.u32 %v485, 16
    %v487 = vxor.u32 %v485, %v486
    %v488 = vmul.u32 %v487, 2246822507
    %v489 = vshrl.u32 %v488, 13
    %v490 = vxor.u32 %v488, %v489
    %v491 = vmul.u32 %v490, 3266489909
    %v492 = vshrl.u32 %v491, 16
    %v493 = vxor.u32 %v491, %v492
    %v494 = vand.u32 %v493, 2147483647
    %vm495 = vcmp.lt.s32.totalorder %v494, 1503238553
    %v496 = vmul.f32 %v481, 1.4285715
    %v497 = vsel %vm495, %v496, 0.0
    %v498 = vpack.c.bf16 %v497, %v497
    %v499 = vld [vmem:[#allocation11] sm:$0xff]
    %v500 = vld [vmem:[#allocation11 + $0x8] sm:$0xff]
    %v501 = vld [vmem:[#allocation11 + $0x10] sm:$0xff]
    %v502 = vld [vmem:[#allocation11 + $0x18] sm:$0xff]
    %v503 = vld [vmem:[#allocation11 + $0x20] sm:$0xff]
    %v504 = vld [vmem:[#allocation11 + $0x28] sm:$0xff]
    %v505 = vld [vmem:[#allocation11 + $0x30] sm:$0xff]
    %v506 = vld [vmem:[#allocation11 + $0x38] sm:$0xff]
    %v507 = vld [vmem:[#allocation11 + $0x40] sm:$0xff]
    %v508 = vld [vmem:[#allocation11 + $0x48] sm:$0xff]
    %v509 = vld [vmem:[#allocation11 + $0x50] sm:$0xff]
    %v510 = vld [vmem:[#allocation11 + $0x58] sm:$0xff]
    %v511 = vld [vmem:[#allocation11 + $0x60] sm:$0xff]
    %v512 = vld [vmem:[#allocation11 + $0x68] sm:$0xff]
    %v513 = vld [vmem:[#allocation11 + $0x70] sm:$0xff]
    %v514 = vld [vmem:[#allocation11 + $0x78] sm:$0xff]
    %v515 = vpack.c.bf16 %v500, %v499
    %v516 = vpack.c.bf16 %v502, %v501
    %v517 = vpack.c.bf16 %v504, %v503
    %v518 = vpack.c.bf16 %v506, %v505
    %v519 = vpack.c.bf16 %v508, %v507
    %v520 = vpack.c.bf16 %v510, %v509
    %v521 = vpack.c.bf16 %v512, %v511
    %v522 = vpack.c.bf16 %v514, %v513
    %v523 = vld [vmem:[%s8] sm:$0x1]
    %v525 = vlaneseq
    %v526 = vshrl.u32 %v525, 7
    %v527 = vsub.s32 0, %v526
    %v528 = vrot.slane %v523, %v527
    %530 = vmatprep.subr.bf16.mxu0 0
    %531 = vmatpush1.bf16.msra.mxu0 %v515
    %532 = vmatprep.subr.bf16.mxu0 0
    %533 = vmatpush1.bf16.msra.mxu0 %v516
    %534 = vmatprep.subr.bf16.mxu0 0
    %535 = vmatpush1.bf16.msra.mxu0 %v517
    %536 = vmatprep.subr.bf16.mxu0 0
    %537 = vmatpush1.bf16.msra.mxu0 %v518
    %538 = vmatprep.subr.bf16.mxu0 0
    %539 = vmatpush1.bf16.msra.mxu0 %v519
    %540 = vmatprep.subr.bf16.mxu0 0
    %541 = vmatpush1.bf16.msra.mxu0 %v520
    %542 = vmatprep.subr.bf16.mxu0 0
    %543 = vmatpush1.bf16.msra.mxu0 %v521
    %544 = vmatprep.subr.bf16.mxu0 0
    %545 = vmatpush1.bf16.msra.mxu0 %v522
    %546 = vmatprep.subr.bf16.mxu0 0
    %547 = vmatpush1.bf16.msra.mxu0 0
    %548 = vmatprep.subr.bf16.mxu0 0
    %549 = vmatpush1.bf16.msra.mxu0 0
    %550 = vmatprep.subr.bf16.mxu0 0
    %551 = vmatpush1.bf16.msra.mxu0 0
    %552 = vmatprep.subr.bf16.mxu0 0
    %553 = vmatpush1.bf16.msra.mxu0 0
    %554 = vmatprep.subr.bf16.mxu0 0
    %555 = vmatpush1.bf16.msra.mxu0 0
    %556 = vmatprep.subr.bf16.mxu0 0
    %557 = vmatpush1.bf16.msra.mxu0 0
    %558 = vmatprep.subr.bf16.mxu0 0
    %559 = vmatpush1.bf16.msra.mxu0 0
    %560 = vmatprep.subr.bf16.mxu0 0
    %561 = vmatpush1.bf16.msra.mxu0 0
    %562 = vmatprep.mubr.bf16.mxu0 0
    %563 = vmatmul.mubr.bf16.gmra.mrb[0].mxu0 %v498
    %v564 = vpop.f32.mrb[0].mxu0
    %v565 = vadd.f32 %v528, %v564
    %v566 = vpop.f32.mrb[0].mxu0
    %v567 = vpop.f32.mrb[0].mxu0
    %v568 = vpop.f32.mrb[0].mxu0
    %569 = vdwg.mxu0
    %570 = vst [vmem:[#allocation12] sm:$0xff] %v565
    // Predicated region
    $region58: #{mlp_classifier_forward.1} parent=1 // pred_check
      _
    $region59: #{mlp_classifier_forward.1} parent=1 // pred_check_branch
      %572 = sbr.rel (0) target = $region61
    $region60: #{mlp_classifier_forward.1} parent=1 // pred_region
      %s574 = ssub.s32 128, 128
      %575 = vsyncadd [#allocation5], %s574
      %s577 = sshll.u32 [#allocation12], 4
      %s578 = int_to_ptr.vmem [resolvable:$true] %s577
      %580 = dma.vmem_to_hbm [thread:$0]  %s578, 128, %s9, [#allocation5]
    $region61: #{mlp_classifier_forward.1} parent=1 // pred_fallthru
      _
    // Predicated region
    $region62: #{mlp_classifier_forward.1} parent=1 // pred_check
      _
    $region63: #{mlp_classifier_forward.1} parent=1 // pred_check_branch
      %582 = sbr.rel (0) target = $region65
    $region64: #{mlp_classifier_forward.1} parent=1 // pred_region
      %583 = dma.done [#allocation5], 128
    $region65: #{mlp_classifier_forward.1} parent=1 // pred_fallthru
      _
    %584 = vsyncpa [#allocation4], 1
    %585 = vsyncpa [#allocation7], 1
    %586 = vsyncpa [#allocation10], 1
    %587 = vsyncpa [#allocation5], 1

</llo_original>
